<compile_context>
chip_gen: v7x
topology: tpu7x:2x2x1
jax: 0.10.0
libtpu: 0.0.40
codegen_flags: <defaults>
</compile_context>

<pallas_src>
import math
import jax
import jax.numpy as jnp
from jax.experimental import pallas as pl
from jax.experimental.pallas import tpu as pltpu


def _convplif_kernel(p_ref, w_ref, pool_ref, prm_ref, v_ref, z_ref, pt_ref,
                     vout_ref, zout_ref, ptout_ref):
    patches = p_ref[...]                                          # (tm, g*K) bf16

    # ff = Conv2d(input) via block-diagonal im2col matmul (MXU) -> lane-dense (tm, g*Hd)
    ff = jnp.dot(patches, w_ref[...], preferred_element_type=jnp.float32)
    # sum of |patch| per location, broadcast over that location's Hd lanes
    pool_sum = jnp.dot(jnp.abs(patches), pool_ref[...],
                       preferred_element_type=jnp.float32)

    # pre-activated parameter table (tiled to 128 lanes in the wrapper)
    thresh    = prm_ref[0:1, :]
    leak_v    = prm_ref[1:2, :]
    omlv      = prm_ref[2:3, :]        # 1 - leak_v
    leak_pt   = prm_ref[3:4, :]
    pool_gain = prm_ref[4:5, :]        # (1 - leak_pt) / (k*k*C)
    add_pt    = prm_ref[5:6, :]

    v  = v_ref[...]
    z  = z_ref[...]
    pt = pt_ref[...]

    pt_out = pt * leak_pt + pool_gain * pool_sum
    # hard_reset=True branch of the torch module
    v_out = v * leak_v * (1.0 - z) + omlv * (ff - add_pt * pt_out)
    # arctanspike forward semantics: spike = (v_out - thresh) > 0
    z_out = (v_out > thresh).astype(zout_ref.dtype)

    vout_ref[...]  = v_out
    zout_ref[...]  = z_out
    ptout_ref[...] = pt_out


def conv_plif_forward(x, prev_state, weight, thresh, leak_v, leak_pt, add_pt,
                      *, kernel_size, stride=1, residual=0.0):
    """x: (B, C, H, W) NCHW.  prev_state: None or (3, B, Hd, Ho, Wo).
    Returns (z_out + residual, stacked_state) exactly like the torch module."""
    B, C, H, W = x.shape
    Hd = weight.shape[0]
    k = kernel_size
    p = k // 2
    Ho = (H + 2 * p - k) // stride + 1
    Wo = (W + 2 * p - k) // stride + 1
    K = C * k * k
    N = B * Ho * Wo

    # ---- lane-group factor: pack g spatial locations per 128-lane row when Hd < 128
    g = 128 // Hd if (Hd <= 128 and 128 % Hd == 0) else 1
    Wide = g * Hd
    GK = g * K
    ng_raw = -(-N // g)                                   # grouped rows before tiling pad

    # ---- VMEM-budgeted, generation-aware tile selection
    try:
        info = pltpu.get_tpu_info()
        vmem_phys = int(getattr(info, "vmem_capacity_bytes", 64 * 2**20))
    except Exception:
        vmem_phys = 64 * 2**20                            # conservative (v7x per-TC VMEM)
    vmem_limit = min(int(vmem_phys * 3 // 4), 96 * 2**20)

    # double-buffered per-grouped-row bytes: bf16 patches in + 6 f32 state streams in/out
    bytes_per_row = 2 * (GK * 2 + 6 * Wide * 4)
    tm = 1024                                             # >=512 rows ~ saturates HBM BW
    tm = min(tm, max(16, (vmem_limit // 2) // bytes_per_row))
    if ng_raw >= 32:
        # keep the grid >= 2 steps so v7x megacore can shard the "parallel" axis
        tm = min(tm, -(-ng_raw // 2))
    tm = max(16, min((tm // 16) * 16, ((ng_raw + 15) // 16) * 16))

    Ng = -(-ng_raw // tm) * tm
    Npad = Ng * g
    pad_rows = Npad - N

    # ---- im2col glue, built directly in NHWC/(N, k*k*C) order (no big transpose of the
    #      k*k-blown-up tensor).  Feature order = kh*k*C + kw*C + c.
    xp = jnp.pad(x, ((0, 0), (0, 0), (p, p), (p, p)))
    xp = jnp.transpose(xp, (0, 2, 3, 1))                  # (B, H+2p, W+2p, C)
    cols = []
    for kh in range(k):
        for kw in range(k):
            cols.append(xp[:, kh:kh + (Ho - 1) * stride + 1:stride,
                              kw:kw + (Wo - 1) * stride + 1:stride, :])   # (B,Ho,Wo,C)
    patches = jnp.stack(cols, axis=3)                     # (B, Ho, Wo, k*k, C)
    patches = patches.reshape(N, K).astype(jnp.bfloat16)  # bf16: halves the HBM stream
    # TODO(synk): for large C, fuse patch extraction into the kernel (stream x via DMA).

    if pad_rows:
        patches = jnp.pad(patches, ((0, pad_rows), (0, 0)))
    patches = patches.reshape(Ng, GK)

    # ---- block-diagonal weight / pooling-mask matrices (tiny, VMEM-resident)
    # torch weight (Hd, C, kh, kw) -> (k, k, C, Hd) -> (K, Hd) matching patch feature order
    w_mat = jnp.transpose(weight, (2, 3, 1, 0)).reshape(K, Hd).astype(jnp.bfloat16)
    eye_g = jnp.eye(g, dtype=jnp.bfloat16)
    w_bd = jnp.kron(eye_g, w_mat)                                    # (GK, Wide)
    pool_bd = jnp.kron(eye_g, jnp.ones((K, Hd), jnp.bfloat16))       # (GK, Wide)

    # ---- hoisted parameter transforms (clamp + sigmoids), tiled lane-dense
    thr = jnp.maximum(thresh.reshape(Hd).astype(jnp.float32), 0.01)
    lv = jax.nn.sigmoid(leak_v.reshape(Hd).astype(jnp.float32))
    lpt = jax.nn.sigmoid(leak_pt.reshape(Hd).astype(jnp.float32))
    apt = jax.nn.sigmoid(add_pt.reshape(Hd).astype(jnp.float32))
    prm_rows = [thr, lv, 1.0 - lv, lpt, (1.0 - lpt) / float(K), apt]
    params = jnp.stack([jnp.tile(r, g) for r in prm_rows], axis=0)   # (6, Wide) f32

    # ---- recurrent state -> lane-dense row layout
    if prev_state is None:
        v0 = z0 = pt0 = jnp.zeros((Ng, Wide), jnp.float32)
    else:
        def to_rows(a):                                   # (B, Hd, Ho, Wo) -> (Ng, Wide)
            a = jnp.transpose(a, (0, 2, 3, 1)).reshape(N, Hd).astype(jnp.float32)
            if pad_rows:
                a = jnp.pad(a, ((0, pad_rows), (0, 0)))
            return a.reshape(Ng, Wide)
        v0, z0, pt0 = to_rows(prev_state[0]), to_rows(prev_state[1]), to_rows(prev_state[2])
    # TODO(synk): when calling this recurrently over T steps, keep v/z/pt in this
    # (Ng, Wide) layout between steps and only convert to NCHW at sequence boundaries.

    row_spec = pl.BlockSpec((tm, Wide), lambda i: (i, 0))
    out_shapes = tuple(jax.ShapeDtypeStruct((Ng, Wide), jnp.float32) for _ in range(3))

    v_out, z_out, pt_out = pl.pallas_call(
        _convplif_kernel,
        out_shape=out_shapes,
        grid_spec=pltpu.PrefetchScalarGridSpec(
            num_scalar_prefetch=0,
            grid=(Ng // tm,),
            in_specs=[pl.BlockSpec((tm, GK), lambda i: (i, 0)),    # patches (bf16)
                      pl.BlockSpec((GK, Wide), lambda i: (0, 0)),  # block-diag conv weight
                      pl.BlockSpec((GK, Wide), lambda i: (0, 0)),  # block-diag pool mask
                      pl.BlockSpec((6, Wide), lambda i: (0, 0)),   # pre-activated params
                      row_spec, row_spec, row_spec],               # v, z, pt
            out_specs=[row_spec, row_spec, row_spec]),
        compiler_params=pltpu.CompilerParams(
            dimension_semantics=("parallel",),
            vmem_limit_bytes=vmem_limit),
    )(patches, w_bd, pool_bd, params, v0, z0, pt0)

    def from_rows(a):                                     # (Ng, Wide) -> (B, Hd, Ho, Wo)
        a = a.reshape(Npad, Hd)[:N]
        return a.reshape(B, Ho, Wo, Hd).transpose(0, 3, 1, 2)

    v_nchw, z_nchw, pt_nchw = from_rows(v_out), from_rows(z_out), from_rows(pt_out)

    if isinstance(residual, (int, float)) and residual == 0:
        out = z_nchw                                      # residual add folded away
    else:
        out = z_nchw + residual
    return out, jnp.stack([v_nchw, z_nchw, pt_nchw])


if __name__ == "__main__":
    # Module hyper-parameters (small, consistent with ConvPLIF.__init__)
    B, C, H, W = 2, 4, 16, 16
    hidden, kernel_size, stride = 32, 3, 1

    key = jax.random.PRNGKey(0)
    k_w, k_lv, k_lpt, k_apt, k_th, k_x, k_s = jax.random.split(key, 7)

    # Deterministic parameter init mirroring the torch module's __init__
    w_scale = math.sqrt(1.0 / C)
    weight = jax.random.uniform(k_w, (hidden, C, kernel_size, kernel_size),
                                minval=-w_scale, maxval=w_scale, dtype=jnp.float32)
    leak_v = jax.random.normal(k_lv, (hidden, 1, 1), jnp.float32) * 0.1 + (-4.0)
    leak_pt = jax.random.normal(k_lpt, (hidden, 1, 1), jnp.float32) * 0.1 + (-4.0)
    add_pt = jax.random.normal(k_apt, (hidden, 1, 1), jnp.float32) * 0.1 + (-2.0)
    thresh = jax.random.normal(k_th, (hidden, 1, 1), jnp.float32) * 0.0 + 0.8

    # Example inputs
    x = jax.random.normal(k_x, (B, C, H, W), jnp.float32)
    Ho = (H + 2 * (kernel_size // 2) - kernel_size) // stride + 1
    Wo = (W + 2 * (kernel_size // 2) - kernel_size) // stride + 1
    prev_state = jax.random.normal(k_s, (3, B, hidden, Ho, Wo), jnp.float32) * 0.1

    out, new_state = conv_plif_forward(
        x, prev_state, weight, thresh, leak_v, leak_pt, add_pt,
        kernel_size=kernel_size, stride=stride, residual=0.0)
    jax.block_until_ready((out, new_state))

    assert out.shape == (B, hidden, Ho, Wo)
    assert new_state.shape == (3, B, hidden, Ho, Wo)
    print("KERNEL_OK")
</pallas_src>

<mosaic_0001>
module attributes {stable_mosaic.version = 11 : i64} {
  func.func @_convplif_kernel(%arg0: i32, %arg1: memref<64x144xbf16, #tpu.memory_space<vmem>>, %arg2: memref<144x128xbf16, #tpu.memory_space<vmem>>, %arg3: memref<144x128xbf16, #tpu.memory_space<vmem>>, %arg4: memref<6x128xf32, #tpu.memory_space<vmem>>, %arg5: memref<64x128xf32, #tpu.memory_space<vmem>>, %arg6: memref<64x128xf32, #tpu.memory_space<vmem>>, %arg7: memref<64x128xf32, #tpu.memory_space<vmem>>, %arg8: memref<64x128xf32, #tpu.memory_space<vmem>>, %arg9: memref<64x128xf32, #tpu.memory_space<vmem>>, %arg10: memref<64x128xf32, #tpu.memory_space<vmem>>) attributes {dimension_semantics = [#tpu.dimension_semantics<parallel>], iteration_bounds = array<i64: 2>, scalar_prefetch = 0 : i64, scratch_operands = 0 : i64, tpu.core_type = #tpu.core_type<tc>, window_params = [{transform_indices = @transform_0, window_bounds = array<i64: 64, 144>}, {pipeline_mode = #tpu.pipeline_mode<synchronous>, transform_indices = @transform_1, window_bounds = array<i64: 144, 128>}, {pipeline_mode = #tpu.pipeline_mode<synchronous>, transform_indices = @transform_2, window_bounds = array<i64: 144, 128>}, {pipeline_mode = #tpu.pipeline_mode<synchronous>, transform_indices = @transform_3, window_bounds = array<i64: 6, 128>}, {transform_indices = @transform_4, window_bounds = array<i64: 64, 128>}, {transform_indices = @transform_5, window_bounds = array<i64: 64, 128>}, {transform_indices = @transform_6, window_bounds = array<i64: 64, 128>}, {transform_indices = @transform_7, window_bounds = array<i64: 64, 128>}, {transform_indices = @transform_8, window_bounds = array<i64: 64, 128>}, {transform_indices = @transform_9, window_bounds = array<i64: 64, 128>}]} {
    %c0 = arith.constant 0 : index
    %c0_0 = arith.constant 0 : index
    %0 = vector.load %arg1[%c0, %c0_0] : memref<64x144xbf16, #tpu.memory_space<vmem>>, vector<64x144xbf16>
    %c0_1 = arith.constant 0 : index
    %c0_2 = arith.constant 0 : index
    %1 = vector.load %arg2[%c0_1, %c0_2] : memref<144x128xbf16, #tpu.memory_space<vmem>>, vector<144x128xbf16>
    %cst = arith.constant dense<0.000000e+00> : vector<64x128xf32>
    %2 = tpu.matmul %0, %1, %cst {dimension_numbers = #tpu.dot_dimension_numbers<[1], [0], [0], [1], [0, 0, 1, 1], [], []>} : vector<64x144xbf16>, vector<144x128xbf16>, vector<64x128xf32> -> vector<64x128xf32>
    %3 = math.absf %0 : vector<64x144xbf16>
    %c0_3 = arith.constant 0 : index
    %c0_4 = arith.constant 0 : index
    %4 = vector.load %arg3[%c0_3, %c0_4] : memref<144x128xbf16, #tpu.memory_space<vmem>>, vector<144x128xbf16>
    %cst_5 = arith.constant dense<0.000000e+00> : vector<64x128xf32>
    %5 = tpu.matmul %3, %4, %cst_5 {dimension_numbers = #tpu.dot_dimension_numbers<[1], [0], [0], [1], [0, 0, 1, 1], [], []>} : vector<64x144xbf16>, vector<144x128xbf16>, vector<64x128xf32> -> vector<64x128xf32>
    %c0_6 = arith.constant 0 : index
    %c0_7 = arith.constant 0 : index
    %6 = vector.load %arg4[%c0_6, %c0_7] : memref<6x128xf32, #tpu.memory_space<vmem>>, vector<1x128xf32>
    %c1 = arith.constant 1 : index
    %c0_8 = arith.constant 0 : index
    %7 = vector.load %arg4[%c1, %c0_8] : memref<6x128xf32, #tpu.memory_space<vmem>>, vector<1x128xf32>
    %c2 = arith.constant 2 : index
    %c0_9 = arith.constant 0 : index
    %8 = vector.load %arg4[%c2, %c0_9] : memref<6x128xf32, #tpu.memory_space<vmem>>, vector<1x128xf32>
    %c3 = arith.constant 3 : index
    %c0_10 = arith.constant 0 : index
    %9 = vector.load %arg4[%c3, %c0_10] : memref<6x128xf32, #tpu.memory_space<vmem>>, vector<1x128xf32>
    %c4 = arith.constant 4 : index
    %c0_11 = arith.constant 0 : index
    %10 = vector.load %arg4[%c4, %c0_11] : memref<6x128xf32, #tpu.memory_space<vmem>>, vector<1x128xf32>
    %c5 = arith.constant 5 : index
    %c0_12 = arith.constant 0 : index
    %11 = vector.load %arg4[%c5, %c0_12] : memref<6x128xf32, #tpu.memory_space<vmem>>, vector<1x128xf32>
    %c0_13 = arith.constant 0 : index
    %c0_14 = arith.constant 0 : index
    %12 = vector.load %arg5[%c0_13, %c0_14] : memref<64x128xf32, #tpu.memory_space<vmem>>, vector<64x128xf32>
    %c0_15 = arith.constant 0 : index
    %c0_16 = arith.constant 0 : index
    %13 = vector.load %arg6[%c0_15, %c0_16] : memref<64x128xf32, #tpu.memory_space<vmem>>, vector<64x128xf32>
    %c0_17 = arith.constant 0 : index
    %c0_18 = arith.constant 0 : index
    %14 = vector.load %arg7[%c0_17, %c0_18] : memref<64x128xf32, #tpu.memory_space<vmem>>, vector<64x128xf32>
    %15 = vector.broadcast %9 : vector<1x128xf32> to vector<64x128xf32>
    %16 = arith.mulf %14, %15 : vector<64x128xf32>
    %17 = vector.broadcast %10 : vector<1x128xf32> to vector<64x128xf32>
    %18 = arith.mulf %17, %5 : vector<64x128xf32>
    %19 = arith.addf %16, %18 : vector<64x128xf32>
    %20 = vector.broadcast %7 : vector<1x128xf32> to vector<64x128xf32>
    %21 = arith.mulf %12, %20 : vector<64x128xf32>
    %cst_19 = arith.constant 1.000000e+00 : f32
    %22 = vector.broadcast %cst_19 : f32 to vector<64x128xf32>
    %23 = arith.subf %22, %13 : vector<64x128xf32>
    %24 = arith.mulf %21, %23 : vector<64x128xf32>
    %25 = vector.broadcast %11 : vector<1x128xf32> to vector<64x128xf32>
    %26 = arith.mulf %25, %19 : vector<64x128xf32>
    %27 = arith.subf %2, %26 : vector<64x128xf32>
    %28 = vector.broadcast %8 : vector<1x128xf32> to vector<64x128xf32>
    %29 = arith.mulf %28, %27 : vector<64x128xf32>
    %30 = arith.addf %24, %29 : vector<64x128xf32>
    %31 = vector.broadcast %6 : vector<1x128xf32> to vector<64x128xf32>
    %32 = arith.cmpf ogt, %30, %31 : vector<64x128xf32>
    %33 = arith.extui %32 : vector<64x128xi1> to vector<64x128xi32>
    %34 = arith.sitofp %33 : vector<64x128xi32> to vector<64x128xf32>
    %c0_20 = arith.constant 0 : index
    %c0_21 = arith.constant 0 : index
    %35 = vector.load %arg8[%c0_20, %c0_21] : memref<64x128xf32, #tpu.memory_space<vmem>>, vector<64x128xf32>
    tpu.vector_store %arg8[%c0_20, %c0_21], %30 {strides = array<i32>} : memref<64x128xf32, #tpu.memory_space<vmem>>, vector<64x128xf32>,
    %c0_22 = arith.constant 0 : index
    %c0_23 = arith.constant 0 : index
    %36 = vector.load %arg9[%c0_22, %c0_23] : memref<64x128xf32, #tpu.memory_space<vmem>>, vector<64x128xf32>
    tpu.vector_store %arg9[%c0_22, %c0_23], %34 {strides = array<i32>} : memref<64x128xf32, #tpu.memory_space<vmem>>, vector<64x128xf32>,
    %c0_24 = arith.constant 0 : index
    %c0_25 = arith.constant 0 : index
    %37 = vector.load %arg10[%c0_24, %c0_25] : memref<64x128xf32, #tpu.memory_space<vmem>>, vector<64x128xf32>
    tpu.vector_store %arg10[%c0_24, %c0_25], %19 {strides = array<i32>} : memref<64x128xf32, #tpu.memory_space<vmem>>, vector<64x128xf32>,
    return
  }
  func.func @transform_0(%arg0: i32) -> (i32, i32) {
    %c0_i32 = arith.constant 0 : i32
    %c0_i32_0 = arith.constant 0 : i32
    return %arg0, %c0_i32 : i32, i32
  }
  func.func @transform_1(%arg0: i32) -> (i32, i32) {
    %c0_i32 = arith.constant 0 : i32
    %c0_i32_0 = arith.constant 0 : i32
    %c0_i32_1 = arith.constant 0 : i32
    return %c0_i32, %c0_i32_0 : i32, i32
  }
  func.func @transform_2(%arg0: i32) -> (i32, i32) {
    %c0_i32 = arith.constant 0 : i32
    %c0_i32_0 = arith.constant 0 : i32
    %c0_i32_1 = arith.constant 0 : i32
    return %c0_i32, %c0_i32_0 : i32, i32
  }
  func.func @transform_3(%arg0: i32) -> (i32, i32) {
    %c0_i32 = arith.constant 0 : i32
    %c0_i32_0 = arith.constant 0 : i32
    %c0_i32_1 = arith.constant 0 : i32
    return %c0_i32, %c0_i32_0 : i32, i32
  }
  func.func @transform_4(%arg0: i32) -> (i32, i32) {
    %c0_i32 = arith.constant 0 : i32
    %c0_i32_0 = arith.constant 0 : i32
    return %arg0, %c0_i32 : i32, i32
  }
  func.func @transform_5(%arg0: i32) -> (i32, i32) {
    %c0_i32 = arith.constant 0 : i32
    %c0_i32_0 = arith.constant 0 : i32
    return %arg0, %c0_i32 : i32, i32
  }
  func.func @transform_6(%arg0: i32) -> (i32, i32) {
    %c0_i32 = arith.constant 0 : i32
    %c0_i32_0 = arith.constant 0 : i32
    return %arg0, %c0_i32 : i32, i32
  }
  func.func @transform_7(%arg0: i32) -> (i32, i32) {
    %c0_i32 = arith.constant 0 : i32
    %c0_i32_0 = arith.constant 0 : i32
    return %arg0, %c0_i32 : i32, i32
  }
  func.func @transform_8(%arg0: i32) -> (i32, i32) {
    %c0_i32 = arith.constant 0 : i32
    %c0_i32_0 = arith.constant 0 : i32
    return %arg0, %c0_i32 : i32, i32
  }
  func.func @transform_9(%arg0: i32) -> (i32, i32) {
    %c0_i32 = arith.constant 0 : i32
    %c0_i32_0 = arith.constant 0 : i32
    return %arg0, %c0_i32 : i32, i32
  }
}

</mosaic_0001>

<llo_original>
// kernel: tpu_custom_call.1
$region0: #{tpu_custom_call.1}
  #allocation0 [shape = 'u32[]', space=smem, size = 0x4, offset = 0x4, fixed_abs, tag = 'smem constant byte address 0x4 - core index']
  #allocation1 [shape = 'u32[144,128]{1,0:T(1,128)}', space=vmem, size = 0x12000, scoped, tag = 'internal scratch']
  %s0 = inlined_call_operand.vmem [shape: bf16[128,144], index: 0, kind: input, shape index: {}]
  %s1 = inlined_call_operand.vmem [shape: bf16[144,128], index: 1, kind: input, shape index: {}]
  %s2 = inlined_call_operand.hbm [shape: bf16[144,128], index: 2, kind: input, shape index: {}]
  %s3 = inlined_call_operand.vmem [shape: f32[6,128], index: 3, kind: input, shape index: {}]
  %s4 = inlined_call_operand.vmem [shape: f32[128,128], index: 4, kind: input, shape index: {}]
  %s5 = inlined_call_operand.hbm [shape: f32[128,128], index: 5, kind: input, shape index: {}]
  %s6 = inlined_call_operand.hbm [shape: f32[128,128], index: 6, kind: input, shape index: {}]
  %s7 = inlined_call_operand.hbm [shape: f32[128,128], index: 7, kind: output, shape index: {0}]
  %s8 = inlined_call_operand.hbm [shape: f32[128,128], index: 8, kind: output, shape index: {1}]
  %s9 = inlined_call_operand.hbm [shape: f32[128,128], index: 9, kind: output, shape index: {2}]
  %10 = xla_tuple %s7, %s8, %s9
  %s11 = sld [smem:[#allocation0]]
  $region89: #{tpu_custom_call.1} parent=0
    _
  %s13 = ssub.s32 1, %s11
  %s14 = scalar_select 0, %s13, %s11
  $region1: #{tpu_custom_call.1} parent=0
    #allocation2 [shape = 'u8[36864]{0}', space=vmem, size = 0x9000, scoped, tag = 'input window, operand 2, single buffered']
    #allocation3 [shape = 's32[2]{0}', space=sflag, size = 0x8, scoped, tag = 'scoped memory for tpu_custom_call.1']
    #allocation4 [shape = 's32[2]{0}', space=sflag, size = 0x8, scoped, tag = 'scoped memory for tpu_custom_call.1']
    #allocation5 [shape = 'u8[65536]{0}', space=vmem, size = 0x10000, scoped, tag = 'input window, operand 5']
    #allocation6 [shape = 's32[2]{0}', space=sflag, size = 0x8, scoped, tag = 'scoped memory for tpu_custom_call.1']
    #allocation7 [shape = 'u8[65536]{0}', space=vmem, size = 0x10000, scoped, tag = 'input window, operand 6']
    #allocation8 [shape = 'u8[65536]{0}', space=vmem, size = 0x10000, scoped, tag = 'output window, operand 0']
    #allocation9 [shape = 'u8[65536]{0}', space=vmem, size = 0x10000, scoped, tag = 'output window, operand 1']
    #allocation10 [shape = 's32[2]{0}', space=sflag, size = 0x8, scoped, tag = 'scoped memory for tpu_custom_call.1']
    #allocation11 [shape = 'u8[65536]{0}', space=vmem, size = 0x10000, scoped, tag = 'output window, operand 2']
    %15 = vsyncpa [#allocation3], 0
    %16 = vsyncpa [#allocation6], 0
    %s17 = scalar_lea.sflag [#allocation6], 1
    %18 = vsyncpa %s17, 0
    %19 = vsyncpa [#allocation4], 0
    %s20 = scalar_lea.sflag [#allocation4], 1
    %21 = vsyncpa %s20, 0
    %22 = vsyncpa [#allocation10], 0
    %s23 = scalar_lea.sflag [#allocation10], 1
    %24 = vsyncpa %s23, 0
    loop: start=0, step=1, limit=4
    $region2: #{tpu_custom_call.1} parent=1 // loop_pre_header
      _
    $region3: #{tpu_custom_call.1} parent=1 // loop_header
      %s26 = sphi 0, %s30
      %p27 = scmp.ge.s32.totalorder %s26, 4
      %s36 = sphi 0, %s38
      %s39 = sphi 0, %s36
      %s40 = sphi 0, %s39
      %s56 = sphi 0, %s40
      %s60 = sphi 0, %s60
      %s62 = sphi 0, %s60
      %s63 = sphi 0, %s62
      %s77 = sphi 0, %s63
      %s81 = sphi 0, %s81
      %s83 = sphi 0, %s81
      %s84 = sphi 0, %s83
      %s98 = sphi 0, %s84
      %s102 = sphi 0, %s102
      %s104 = sphi 0, %s102
      %s105 = sphi 0, %s104
      %s119 = sphi 0, %s105
      %s125 = sphi 0, %s127
      %s128 = sphi 0, %s125
      %s129 = sphi 0, %s128
      %s145 = sphi 0, %s129
      %s151 = sphi 0, %s153
      %s154 = sphi 0, %s151
      %s155 = sphi 0, %s154
      %s171 = sphi 0, %s155
      %s177 = sphi 0, %s179
      %s180 = sphi 0, %s177
      %s181 = sphi 0, %s180
      %s197 = sphi 0, %s181
      %s203 = sphi 0, %s205
      %s206 = sphi 0, %s203
      %s207 = sphi 0, %s206
      %s223 = sphi 0, %s207
      %s229 = sphi 0, %s231
      %s232 = sphi 0, %s229
      %s233 = sphi 0, %s232
      %s249 = sphi 0, %s233
      %s255 = sphi 0, %s257
      %s258 = sphi 0, %s255
      %s259 = sphi 0, %s258
      %s275 = sphi 0, %s259
    $region4: #{tpu_custom_call.1} parent=1 // loop_header_branch
      %29 = sbr.rel (%p27) target = $region8
    $region5: #{tpu_custom_call.1} parent=1 // loop_body
      %s31 = ssub.s32 %s26, 1
      %s32 = ssub.s32 %s26, 2
      %s33 = sadd.s32 %s26, 1
      %s34 = ssub.s32 %s26, %s33
      %p35 = scmp.eq.s32.totalorder %s34, 0
      %s37 = sadd.s32 %s36, 1
      %s38 = scalar_select %p35, %s36, %s37
      %p41 = pneg %p35
      %p42 = scmp.eq.s32.totalorder %s26, 1
      %p43 = por %p41, %p42
      %p44 = scmp.ne.s32.totalorder %s36, %s39
      %p45 = scmp.eq.s32.totalorder %s26, 0
      %p46 = por %p44, %p45
      %p47 = scmp.ne.s32.totalorder %s36, %s39
      %p48 = scmp.eq.s32.totalorder %s31, 1
      %p49 = por %p47, %p48
      %p50 = scmp.ne.s32.totalorder %s39, %s40
      %p51 = scmp.eq.s32.totalorder %s31, 0
      %p52 = por %p50, %p51
      %p53 = scmp.ne.s32.totalorder %s39, %s40
      %p54 = scmp.eq.s32.totalorder %s32, 1
      %p55 = por %p53, %p54
      %p57 = scmp.ne.s32.totalorder %s40, %s56
      %p58 = scmp.eq.s32.totalorder %s32, 0
      %p59 = por %p57, %p58
      %s61 = sadd.s32 %s60, 1
      %p64 = scmp.eq.s32.totalorder %s26, 1
      %p65 = scmp.ne.s32.totalorder %s60, %s62
      %p66 = scmp.eq.s32.totalorder %s26, 0
      %p67 = por %p65, %p66
      %p68 = scmp.ne.s32.totalorder %s60, %s62
      %p69 = scmp.eq.s32.totalorder %s31, 1
      %p70 = por %p68, %p69
      %p71 = scmp.ne.s32.totalorder %s62, %s63
      %p72 = scmp.eq.s32.totalorder %s31, 0
      %p73 = por %p71, %p72
      %p74 = scmp.ne.s32.totalorder %s62, %s63
      %p75 = scmp.eq.s32.totalorder %s32, 1
      %p76 = por %p74, %p75
      %p78 = scmp.ne.s32.totalorder %s63, %s77
      %p79 = scmp.eq.s32.totalorder %s32, 0
      %p80 = por %p78, %p79
      %s82 = sadd.s32 %s81, 1
      %p85 = scmp.eq.s32.totalorder %s26, 1
      %p86 = scmp.ne.s32.totalorder %s81, %s83
      %p87 = scmp.eq.s32.totalorder %s26, 0
      %p88 = por %p86, %p87
      %p89 = scmp.ne.s32.totalorder %s81, %s83
      %p90 = scmp.eq.s32.totalorder %s31, 1
      %p91 = por %p89, %p90
      %p92 = scmp.ne.s32.totalorder %s83, %s84
      %p93 = scmp.eq.s32.totalorder %s31, 0
      %p94 = por %p92, %p93
      %p95 = scmp.ne.s32.totalorder %s83, %s84
      %p96 = scmp.eq.s32.totalorder %s32, 1
      %p97 = por %p95, %p96
      %p99 = scmp.ne.s32.totalorder %s84, %s98
      %p100 = scmp.eq.s32.totalorder %s32, 0
      %p101 = por %p99, %p100
      %s103 = sadd.s32 %s102, 1
      %p106 = scmp.eq.s32.totalorder %s26, 1
      %p107 = scmp.ne.s32.totalorder %s102, %s104
      %p108 = scmp.eq.s32.totalorder %s26, 0
      %p109 = por %p107, %p108
      %p110 = scmp.ne.s32.totalorder %s102, %s104
      %p111 = scmp.eq.s32.totalorder %s31, 1
      %p112 = por %p110, %p111
      %p113 = scmp.ne.s32.totalorder %s104, %s105
      %p114 = scmp.eq.s32.totalorder %s31, 0
      %p115 = por %p113, %p114
      %p116 = scmp.ne.s32.totalorder %s104, %s105
      %p117 = scmp.eq.s32.totalorder %s32, 1
      %p118 = por %p116, %p117
      %p120 = scmp.ne.s32.totalorder %s105, %s119
      %p121 = scmp.eq.s32.totalorder %s32, 0
      %p122 = por %p120, %p121
      %s123 = ssub.s32 %s26, %s33
      %p124 = scmp.eq.s32.totalorder %s123, 0
      %s126 = sadd.s32 %s125, 1
      %s127 = scalar_select %p124, %s125, %s126
      %p130 = pneg %p124
      %p131 = scmp.eq.s32.totalorder %s26, 1
      %p132 = por %p130, %p131
      %p133 = scmp.ne.s32.totalorder %s125, %s128
      %p134 = scmp.eq.s32.totalorder %s26, 0
      %p135 = por %p133, %p134
      %p136 = scmp.ne.s32.totalorder %s125, %s128
      %p137 = scmp.eq.s32.totalorder %s31, 1
      %p138 = por %p136, %p137
      %p139 = scmp.ne.s32.totalorder %s128, %s129
      %p140 = scmp.eq.s32.totalorder %s31, 0
      %p141 = por %p139, %p140
      %p142 = scmp.ne.s32.totalorder %s128, %s129
      %p143 = scmp.eq.s32.totalorder %s32, 1
      %p144 = por %p142, %p143
      %p146 = scmp.ne.s32.totalorder %s129, %s145
      %p147 = scmp.eq.s32.totalorder %s32, 0
      %p148 = por %p146, %p147
      %s149 = ssub.s32 %s26, %s33
      %p150 = scmp.eq.s32.totalorder %s149, 0
      %s152 = sadd.s32 %s151, 1
      %s153 = scalar_select %p150, %s151, %s152
      %p156 = pneg %p150
      %p157 = scmp.eq.s32.totalorder %s26, 1
      %p158 = por %p156, %p157
      %p159 = scmp.ne.s32.totalorder %s151, %s154
      %p160 = scmp.eq.s32.totalorder %s26, 0
      %p161 = por %p159, %p160
      %p162 = scmp.ne.s32.totalorder %s151, %s154
      %p163 = scmp.eq.s32.totalorder %s31, 1
      %p164 = por %p162, %p163
      %p165 = scmp.ne.s32.totalorder %s154, %s155
      %p166 = scmp.eq.s32.totalorder %s31, 0
      %p167 = por %p165, %p166
      %p168 = scmp.ne.s32.totalorder %s154, %s155
      %p169 = scmp.eq.s32.totalorder %s32, 1
      %p170 = por %p168, %p169
      %p172 = scmp.ne.s32.totalorder %s155, %s171
      %p173 = scmp.eq.s32.totalorder %s32, 0
      %p174 = por %p172, %p173
      %s175 = ssub.s32 %s26, %s33
      %p176 = scmp.eq.s32.totalorder %s175, 0
      %s178 = sadd.s32 %s177, 1
      %s179 = scalar_select %p176, %s177, %s178
      %p182 = pneg %p176
      %p183 = scmp.eq.s32.totalorder %s26, 1
      %p184 = por %p182, %p183
      %p185 = scmp.ne.s32.totalorder %s177, %s180
      %p186 = scmp.eq.s32.totalorder %s26, 0
      %p187 = por %p185, %p186
      %p188 = scmp.ne.s32.totalorder %s177, %s180
      %p189 = scmp.eq.s32.totalorder %s31, 1
      %p190 = por %p188, %p189
      %p191 = scmp.ne.s32.totalorder %s180, %s181
      %p192 = scmp.eq.s32.totalorder %s31, 0
      %p193 = por %p191, %p192
      %p194 = scmp.ne.s32.totalorder %s180, %s181
      %p195 = scmp.eq.s32.totalorder %s32, 1
      %p196 = por %p194, %p195
      %p198 = scmp.ne.s32.totalorder %s181, %s197
      %p199 = scmp.eq.s32.totalorder %s32, 0
      %p200 = por %p198, %p199
      %s201 = ssub.s32 %s26, %s33
      %p202 = scmp.eq.s32.totalorder %s201, 0
      %s204 = sadd.s32 %s203, 1
      %s205 = scalar_select %p202, %s203, %s204
      %p208 = pneg %p202
      %p209 = scmp.eq.s32.totalorder %s26, 1
      %p210 = por %p208, %p209
      %p211 = scmp.ne.s32.totalorder %s203, %s206
      %p212 = scmp.eq.s32.totalorder %s26, 0
      %p213 = por %p211, %p212
      %p214 = scmp.ne.s32.totalorder %s203, %s206
      %p215 = scmp.eq.s32.totalorder %s31, 1
      %p216 = por %p214, %p215
      %p217 = scmp.ne.s32.totalorder %s206, %s207
      %p218 = scmp.eq.s32.totalorder %s31, 0
      %p219 = por %p217, %p218
      %p220 = scmp.ne.s32.totalorder %s206, %s207
      %p221 = scmp.eq.s32.totalorder %s32, 1
      %p222 = por %p220, %p221
      %p224 = scmp.ne.s32.totalorder %s207, %s223
      %p225 = scmp.eq.s32.totalorder %s32, 0
      %p226 = por %p224, %p225
      %s227 = ssub.s32 %s26, %s33
      %p228 = scmp.eq.s32.totalorder %s227, 0
      %s230 = sadd.s32 %s229, 1
      %s231 = scalar_select %p228, %s229, %s230
      %p234 = pneg %p228
      %p235 = scmp.eq.s32.totalorder %s26, 1
      %p236 = por %p234, %p235
      %p237 = scmp.ne.s32.totalorder %s229, %s232
      %p238 = scmp.eq.s32.totalorder %s26, 0
      %p239 = por %p237, %p238
      %p240 = scmp.ne.s32.totalorder %s229, %s232
      %p241 = scmp.eq.s32.totalorder %s31, 1
      %p242 = por %p240, %p241
      %p243 = scmp.ne.s32.totalorder %s232, %s233
      %p244 = scmp.eq.s32.totalorder %s31, 0
      %p245 = por %p243, %p244
      %p246 = scmp.ne.s32.totalorder %s232, %s233
      %p247 = scmp.eq.s32.totalorder %s32, 1
      %p248 = por %p246, %p247
      %p250 = scmp.ne.s32.totalorder %s233, %s249
      %p251 = scmp.eq.s32.totalorder %s32, 0
      %p252 = por %p250, %p251
      %s253 = ssub.s32 %s26, %s33
      %p254 = scmp.eq.s32.totalorder %s253, 0
      %s256 = sadd.s32 %s255, 1
      %s257 = scalar_select %p254, %s255, %s256
      %p260 = pneg %p254
      %p261 = scmp.eq.s32.totalorder %s26, 1
      %p262 = por %p260, %p261
      %p263 = scmp.ne.s32.totalorder %s255, %s258
      %p264 = scmp.eq.s32.totalorder %s26, 0
      %p265 = por %p263, %p264
      %p266 = scmp.ne.s32.totalorder %s255, %s258
      %p267 = scmp.eq.s32.totalorder %s31, 1
      %p268 = por %p266, %p267
      %p269 = scmp.ne.s32.totalorder %s258, %s259
      %p270 = scmp.eq.s32.totalorder %s31, 0
      %p271 = por %p269, %p270
      %p272 = scmp.ne.s32.totalorder %s258, %s259
      %p273 = scmp.eq.s32.totalorder %s32, 1
      %p274 = por %p272, %p273
      %p276 = scmp.ne.s32.totalorder %s259, %s275
      %p277 = scmp.eq.s32.totalorder %s32, 0
      %p278 = por %p276, %p277
      %p279 = scmp.le.s32.totalorder 1, %s26
      %p280 = scmp.lt.s32.totalorder %s26, 3
      %p281 = pnand %p279, %p280
      %p282 = pneg %p281
      // Predicated region
      $region9: #{tpu_custom_call.1} parent=5 // pred_check
        _
      $region10: #{tpu_custom_call.1} parent=5 // pred_check_branch
        %284 = sbr.rel (%p281) target = $region12
      $region11: #{tpu_custom_call.1} parent=5 // pred_region
        %s285 = ssub.s32 %s26, 1
        // Predicated region
        $region13: #{tpu_custom_call.1} parent=11 // pred_check
          %p286 = pneg %p73
        $region14: #{tpu_custom_call.1} parent=11 // pred_check_branch
          %288 = sbr.rel (%p286) target = $region16
        $region15: #{tpu_custom_call.1} parent=11 // pred_region
          _
        $region16: #{tpu_custom_call.1} parent=11 // pred_fallthru
          _
        // Predicated region
        $region17: #{tpu_custom_call.1} parent=11 // pred_check
          %p289 = pneg %p94
        $region18: #{tpu_custom_call.1} parent=11 // pred_check_branch
          %291 = sbr.rel (%p289) target = $region20
        $region19: #{tpu_custom_call.1} parent=11 // pred_region
          %s293 = ssub.s32 1152, 1152
          %294 = vsyncadd [#allocation3], %s293
          %s295 = sshll.u32 [#allocation2], 4
          %s296 = int_to_ptr.vmem [resolvable:$true] %s295
          %301 = dma.hbm_to_vmem [thread:$0]  %s2, 1152, %s296, [#allocation3], 64, 64, 4
        $region20: #{tpu_custom_call.1} parent=11 // pred_fallthru
          _
        // Predicated region
        $region21: #{tpu_custom_call.1} parent=11 // pred_check
          %p302 = pneg %p115
        $region22: #{tpu_custom_call.1} parent=11 // pred_check_branch
          %304 = sbr.rel (%p302) target = $region24
        $region23: #{tpu_custom_call.1} parent=11 // pred_region
          _
        $region24: #{tpu_custom_call.1} parent=11 // pred_fallthru
          _
      $region12: #{tpu_custom_call.1} parent=5 // pred_fallthru
        _
      %p305 = scmp.lt.s32.totalorder %s26, 2
      // Predicated region
      $region25: #{tpu_custom_call.1} parent=5 // pred_check
        %p306 = pneg %p305
      $region26: #{tpu_custom_call.1} parent=5 // pred_check_branch
        %308 = sbr.rel (%p306) target = $region28
      $region27: #{tpu_custom_call.1} parent=5 // pred_region
        // Predicated region
        $region29: #{tpu_custom_call.1} parent=27 // pred_check
          %p309 = pneg %p46
        $region30: #{tpu_custom_call.1} parent=27 // pred_check_branch
          %311 = sbr.rel (%p309) target = $region32
        $region31: #{tpu_custom_call.1} parent=27 // pred_region
          %s312 = smul.u32 8, %s26
          %p313 = scmp.lt.s32.totalorder %s312, 15
          %s314 = scalar_select %p313, %s312, 15
          %s315 = smul.addr %s314, 2
          %s316 = smul.addr %s315, 4
          %s317 = scalar_lea.vmem %s0, %s316
          %s318 = smul.u32 8, %s26
        $region32: #{tpu_custom_call.1} parent=27 // pred_fallthru
          _
        // Predicated region
        $region33: #{tpu_custom_call.1} parent=27 // pred_check
          %p319 = pneg %p135
        $region34: #{tpu_custom_call.1} parent=27 // pred_check_branch
          %321 = sbr.rel (%p319) target = $region36
        $region35: #{tpu_custom_call.1} parent=27 // pred_region
          %s322 = smul.u32 8, %s26
          %p323 = scmp.lt.s32.totalorder %s322, 15
          %s324 = scalar_select %p323, %s322, 15
          %s325 = smul.addr %s324, 8
          %s326 = scalar_lea.vmem %s4, %s325
          %s327 = smul.u32 8, %s26
        $region36: #{tpu_custom_call.1} parent=27 // pred_fallthru
          _
        // Predicated region
        $region37: #{tpu_custom_call.1} parent=27 // pred_check
          %p328 = pneg %p161
        $region38: #{tpu_custom_call.1} parent=27 // pred_check_branch
          %330 = sbr.rel (%p328) target = $region40
        $region39: #{tpu_custom_call.1} parent=27 // pred_region
          %s331 = sand.u32 %s26, 1
          %s332 = scalar_lea.sflag [#allocation6], %s331
          %s333 = sand.u32 %s151, 1
          %s334 = smul.addr %s333, 64
          %s335 = scalar_lea.vmem [#allocation5], %s334
          %s336 = smul.u32 8, %s26
          %s338 = ssub.s32 1024, 1024
          %339 = vsyncadd %s332, %s338
          %s340 = smul.addr %s336, 128
          %s341 = scalar_lea.hbm %s5, %s340
          %s342 = sshll.u32 %s335, 4
          %s343 = int_to_ptr.vmem [resolvable:$true] %s342
          %348 = dma.hbm_to_vmem [thread:$0]  %s341, 1024, %s343, %s332, 128, 128, 8
        $region40: #{tpu_custom_call.1} parent=27 // pred_fallthru
          _
        // Predicated region
        $region41: #{tpu_custom_call.1} parent=27 // pred_check
          %p349 = pneg %p187
        $region42: #{tpu_custom_call.1} parent=27 // pred_check_branch
          %351 = sbr.rel (%p349) target = $region44
        $region43: #{tpu_custom_call.1} parent=27 // pred_region
          %s352 = sand.u32 %s26, 1
          %s353 = scalar_lea.sflag [#allocation6], %s352
          %s354 = sand.u32 %s177, 1
          %s355 = smul.addr %s354, 64
          %s356 = scalar_lea.vmem [#allocation7], %s355
          %s357 = smul.u32 8, %s26
          %s359 = ssub.s32 1024, 1024
          %360 = vsyncadd %s353, %s359
          %s361 = smul.addr %s357, 128
          %s362 = scalar_lea.hbm %s6, %s361
          %s363 = sshll.u32 %s356, 4
          %s364 = int_to_ptr.vmem [resolvable:$true] %s363
          %369 = dma.hbm_to_vmem [thread:$0]  %s362, 1024, %s364, %s353, 128, 128, 8
        $region44: #{tpu_custom_call.1} parent=27 // pred_fallthru
          _
      $region28: #{tpu_custom_call.1} parent=5 // pred_fallthru
        _
      %p370 = scmp.le.s32.totalorder 1, %s26
      %p371 = scmp.lt.s32.totalorder %s26, 3
      %p372 = pnand %p370, %p371
      %p373 = pneg %p372
      // Predicated region
      $region45: #{tpu_custom_call.1} parent=5 // pred_check
        _
      $region46: #{tpu_custom_call.1} parent=5 // pred_check_branch
        %375 = sbr.rel (%p372) target = $region48
      $region47: #{tpu_custom_call.1} parent=5 // pred_region
        %s376 = ssub.s32 %s26, 1
        // Predicated region
        $region49: #{tpu_custom_call.1} parent=47 // pred_check
          %p377 = pneg %p94
        $region50: #{tpu_custom_call.1} parent=47 // pred_check_branch
          %379 = sbr.rel (%p377) target = $region52
        $region51: #{tpu_custom_call.1} parent=47 // pred_region
          %380 = dma.done [#allocation3], 1152
        $region52: #{tpu_custom_call.1} parent=47 // pred_fallthru
          _
        %s381 = sand.u32 %s31, 1
        %s382 = scalar_lea.sflag [#allocation6], %s381
        %s383 = sand.u32 %s154, 1
        %s384 = smul.addr %s383, 64
        %s385 = scalar_lea.vmem [#allocation5], %s384
        // Predicated region
        $region53: #{tpu_custom_call.1} parent=47 // pred_check
          %p386 = pneg %p167
        $region54: #{tpu_custom_call.1} parent=47 // pred_check_branch
          %388 = sbr.rel (%p386) target = $region56
        $region55: #{tpu_custom_call.1} parent=47 // pred_region
          %389 = dma.done %s382, 1024
        $region56: #{tpu_custom_call.1} parent=47 // pred_fallthru
          _
        %s390 = sand.u32 %s31, 1
        %s391 = scalar_lea.sflag [#allocation6], %s390
        %s392 = sand.u32 %s180, 1
        %s393 = smul.addr %s392, 64
        %s394 = scalar_lea.vmem [#allocation7], %s393
        // Predicated region
        $region57: #{tpu_custom_call.1} parent=47 // pred_check
          %p395 = pneg %p193
        $region58: #{tpu_custom_call.1} parent=47 // pred_check_branch
          %397 = sbr.rel (%p395) target = $region60
        $region59: #{tpu_custom_call.1} parent=47 // pred_region
          %398 = dma.done %s391, 1024
        $region60: #{tpu_custom_call.1} parent=47 // pred_fallthru
          _
        %s399 = smul.u32 8, %s31
        %p400 = scmp.lt.s32.totalorder %s399, 15
        %s401 = scalar_select %p400, %s399, 15
        %s402 = smul.addr %s401, 2
        %s403 = smul.addr %s402, 4
        %s404 = scalar_lea.vmem %s0, %s403
        %p405 = pneg %p52
        %p406 = pneg %p49
        %p407 = pneg %p73
        %p408 = pneg %p70
        %p409 = pneg %p94
        %p410 = pneg %p91
        %p411 = pneg %p115
        %p412 = pneg %p112
        %s413 = smul.u32 8, %s31
        %p414 = scmp.lt.s32.totalorder %s413, 15
        %s415 = scalar_select %p414, %s413, 15
        %s416 = smul.addr %s415, 8
        %s417 = scalar_lea.vmem %s4, %s416
        %p418 = pneg %p141
        %p419 = pneg %p138
        %s420 = sand.u32 %s31, 1
        %s421 = scalar_lea.sflag [#allocation6], %s420
        %s422 = sand.u32 %s154, 1
        %s423 = smul.addr %s422, 64
        %s424 = scalar_lea.vmem [#allocation5], %s423
        %p425 = pneg %p167
        %p426 = pneg %p164
        %s427 = sand.u32 %s31, 1
        %s428 = scalar_lea.sflag [#allocation6], %s427
        %s429 = sand.u32 %s180, 1
        %s430 = smul.addr %s429, 64
        %s431 = scalar_lea.vmem [#allocation7], %s430
        %p432 = pneg %p193
        %p433 = pneg %p190
        %p434 = pneg %p219
        %p435 = pneg %p216
        %s436 = sand.u32 %s206, 1
        %s437 = scalar_lea.sflag [#allocation4], %s436
        %s438 = sand.u32 %s206, 1
        %s439 = smul.addr %s438, 64
        %s440 = scalar_lea.vmem [#allocation8], %s439
        %p441 = pneg %p245
        %p442 = pneg %p242
        %s443 = sand.u32 %s31, 1
        %s444 = scalar_lea.sflag [#allocation10], %s443
        %s445 = sand.u32 %s232, 1
        %s446 = smul.addr %s445, 64
        %s447 = scalar_lea.vmem [#allocation9], %s446
        %p448 = pneg %p271
        %p449 = pneg %p268
        %s450 = sand.u32 %s31, 1
        %s451 = scalar_lea.sflag [#allocation10], %s450
        %s452 = sand.u32 %s258, 1
        %s453 = smul.addr %s452, 64
        %s454 = scalar_lea.vmem [#allocation11], %s453
        %s455 = smul.u32 8, %s31
        %p456 = scmp.lt.s32.totalorder %s455, 15
        %s457 = scalar_select %p456, %s455, 15
        %s458 = smul.addr %s457, 2
        %s459 = smul.addr %s458, 4
        %s460 = scalar_lea.vmem %s0, %s459
        %s461 = smul.u32 8, %s31
        %s462 = smul.u32 8, %s31
        %p463 = scmp.lt.s32.totalorder %s462, 15
        %s464 = scalar_select %p463, %s462, 15
        %s465 = smul.addr %s464, 8
        %s466 = scalar_lea.vmem %s4, %s465
        %s467 = smul.u32 8, %s31
        %s468 = smul.u32 8, %s31
        %s469 = smul.u32 8, %s31
        %s470 = smul.u32 8, %s31
        %s471 = smul.u32 8, %s31
        %s472 = smul.u32 8, %s31
        %v474 = vld [vmem:[%s460] sm:$0xff]
        %v475 = vld [vmem:[%s460 + $0x8] sm:$0xff]
        %v476 = vld [vmem:[%s460 + $0x10] sm:$0xff]
        %v477 = vld [vmem:[%s460 + $0x18] sm:$0xff]
        %v478 = vld [vmem:[%s460 + $0x20] sm:$0xff]
        %v479 = vld [vmem:[%s460 + $0x28] sm:$0xff]
        %v480 = vld [vmem:[%s460 + $0x30] sm:$0xff]
        %v481 = vld [vmem:[%s460 + $0x38] sm:$0xff]
        %v482 = vld [vmem:[%s1] sm:$0xf]
        %v483 = vld [vmem:[%s1 + $0x4] sm:$0xf]
        %v484 = vld [vmem:[%s1 + $0x8] sm:$0xf]
        %v485 = vld [vmem:[%s1 + $0xc] sm:$0xf]
        %v486 = vld [vmem:[%s1 + $0x10] sm:$0xf]
        %v487 = vld [vmem:[%s1 + $0x14] sm:$0xf]
        %v488 = vld [vmem:[%s1 + $0x18] sm:$0xf]
        %v489 = vld [vmem:[%s1 + $0x1c] sm:$0xf]
        %v490 = vld [vmem:[%s1 + $0x20] sm:$0xf]
        %v491 = vld [vmem:[%s1 + $0x24] sm:$0xf]
        %v492 = vld [vmem:[%s1 + $0x28] sm:$0xf]
        %v493 = vld [vmem:[%s1 + $0x2c] sm:$0xf]
        %v494 = vld [vmem:[%s1 + $0x30] sm:$0xf]
        %v495 = vld [vmem:[%s1 + $0x34] sm:$0xf]
        %v496 = vld [vmem:[%s1 + $0x38] sm:$0xf]
        %v497 = vld [vmem:[%s1 + $0x3c] sm:$0xf]
        %v498 = vld [vmem:[%s1 + $0x40] sm:$0xf]
        %v499 = vld [vmem:[%s1 + $0x44] sm:$0xf]
        %v508 = vunpack.c.l.b16 %v474
        %v509 = vunpack.c.h.b16 %v474
        %v510 = vunpack.c.l.b16 %v475
        %v511 = vunpack.c.h.b16 %v475
        %v512 = vunpack.c.l.b16 %v476
        %v513 = vunpack.c.h.b16 %v476
        %v514 = vunpack.c.l.b16 %v477
        %v515 = vunpack.c.h.b16 %v477
        %v516 = vunpack.c.l.b16 %v478
        %v517 = vunpack.c.h.b16 %v478
        %v518 = vunpack.c.l.b16 %v479
        %v519 = vunpack.c.h.b16 %v479
        %v520 = vunpack.c.l.b16 %v480
        %v521 = vunpack.c.h.b16 %v480
        %v522 = vunpack.c.l.b16 %v481
        %v523 = vunpack.c.h.b16 %v481
        %v524 = vpack.c.b16 %v510, %v508
        %v525 = vpack.c.b16 %v511, %v509
        %v526 = vpack.c.b16 %v514, %v512
        %v527 = vpack.c.b16 %v515, %v513
        %v528 = vpack.c.b16 %v518, %v516
        %v529 = vpack.c.b16 %v519, %v517
        %v530 = vpack.c.b16 %v522, %v520
        %v531 = vpack.c.b16 %v523, %v521
        %v554 = vunpack.c.l.b16 %v482
        %v555 = vunpack.c.l.b16 %v483
        %v556 = vunpack.c.l.b16 %v484
        %v557 = vunpack.c.l.b16 %v485
        %v558 = vunpack.c.l.b16 %v486
        %v559 = vunpack.c.l.b16 %v487
        %v560 = vunpack.c.l.b16 %v488
        %v561 = vunpack.c.l.b16 %v489
        %v562 = vunpack.c.l.b16 %v490
        %v563 = vunpack.c.l.b16 %v491
        %v564 = vunpack.c.l.b16 %v492
        %v565 = vunpack.c.l.b16 %v493
        %v566 = vunpack.c.l.b16 %v494
        %v567 = vunpack.c.l.b16 %v495
        %v568 = vunpack.c.l.b16 %v496
        %v569 = vunpack.c.l.b16 %v497
        %v570 = vunpack.c.l.b16 %v498
        %v571 = vunpack.c.l.b16 %v499
        %v572 = vpack.c.b16 %v555, %v554
        %v573 = vpack.c.b16 %v557, %v556
        %v574 = vpack.c.b16 %v559, %v558
        %v575 = vpack.c.b16 %v561, %v560
        %v576 = vpack.c.b16 %v563, %v562
        %v577 = vpack.c.b16 %v565, %v564
        %v578 = vpack.c.b16 %v567, %v566
        %v579 = vpack.c.b16 %v569, %v568
        %v580 = vpack.c.b16 %v571, %v570
        %vm590 = vcmask 130048
        %v592 = vsel %vm590, %v525, 0
        %v595 = vsel %vm590, %v527, 0
        %v598 = vsel %vm590, %v529, 0
        %v601 = vsel %vm590, %v531, 0
        %603 = vmatprep.subr.bf16.mxu0 0
        %604 = vmatpush1.bf16.msra.mxu0 %v572
        %605 = vmatprep.subr.bf16.mxu0 0
        %606 = vmatpush1.bf16.msra.mxu0 %v573
        %607 = vmatprep.subr.bf16.mxu0 0
        %608 = vmatpush1.bf16.msra.mxu0 %v574
        %609 = vmatprep.subr.bf16.mxu0 0
        %610 = vmatpush1.bf16.msra.mxu0 %v575
        %611 = vmatprep.subr.bf16.mxu0 0
        %612 = vmatpush1.bf16.msra.mxu0 %v576
        %613 = vmatprep.subr.bf16.mxu0 0
        %614 = vmatpush1.bf16.msra.mxu0 %v577
        %615 = vmatprep.subr.bf16.mxu0 0
        %616 = vmatpush1.bf16.msra.mxu0 %v578
        %617 = vmatprep.subr.bf16.mxu0 0
        %618 = vmatpush1.bf16.msra.mxu0 %v579
        %619 = vmatprep.subr.bf16.mxu0 0
        %620 = vmatpush1.bf16.msra.mxu0 %v580
        %621 = vmatprep.subr.bf16.mxu0 0
        %622 = vmatpush1.bf16.msra.mxu0 0
        %623 = vmatprep.subr.bf16.mxu0 0
        %624 = vmatpush1.bf16.msra.mxu0 0
        %625 = vmatprep.subr.bf16.mxu0 0
        %626 = vmatpush1.bf16.msra.mxu0 0
        %627 = vmatprep.subr.bf16.mxu0 0
        %628 = vmatpush1.bf16.msra.mxu0 0
        %629 = vmatprep.subr.bf16.mxu0 0
        %630 = vmatpush1.bf16.msra.mxu0 0
        %631 = vmatprep.subr.bf16.mxu0 0
        %632 = vmatpush1.bf16.msra.mxu0 0
        %633 = vmatprep.subr.bf16.mxu0 0
        %634 = vmatpush1.bf16.msra.mxu0 0
        %635 = vmatprep.mubr.bf16.mxu0 %v592
        %636 = vmatmul.mubr.bf16.gmra.mrb[0].mxu0 %v524
        %v637 = vpop.f32.mrb[0].mxu0
        %v638 = vadd.f32 0.0, %v637
        %v639 = vpop.f32.mrb[0].mxu0
        %v640 = vpop.f32.mrb[0].mxu0
        %v641 = vadd.f32 0.0, %v640
        %v642 = vpop.f32.mrb[0].mxu0
        %643 = vmatprep.mubr.bf16.mxu0 %v595
        %644 = vmatmul.mubr.bf16.gmra.mrb[0].mxu0 %v526
        %v645 = vpop.f32.mrb[0].mxu0
        %v646 = vadd.f32 0.0, %v645
        %v647 = vpop.f32.mrb[0].mxu0
        %v648 = vpop.f32.mrb[0].mxu0
        %v649 = vadd.f32 0.0, %v648
        %v650 = vpop.f32.mrb[0].mxu0
        %651 = vmatprep.mubr.bf16.mxu0 %v598
        %652 = vmatmul.mubr.bf16.gmra.mrb[0].mxu0 %v528
        %v653 = vpop.f32.mrb[0].mxu0
        %v654 = vadd.f32 0.0, %v653
        %v655 = vpop.f32.mrb[0].mxu0
        %v656 = vpop.f32.mrb[0].mxu0
        %v657 = vadd.f32 0.0, %v656
        %v658 = vpop.f32.mrb[0].mxu0
        %659 = vmatprep.mubr.bf16.mxu0 %v601
        %660 = vmatmul.mubr.bf16.gmra.mrb[0].mxu0 %v530
        %v661 = vpop.f32.mrb[0].mxu0
        %v662 = vadd.f32 0.0, %v661
        %v663 = vpop.f32.mrb[0].mxu0
        %v664 = vpop.f32.mrb[0].mxu0
        %v665 = vadd.f32 0.0, %v664
        %v666 = vpop.f32.mrb[0].mxu0
        %667 = vdwg.mxu0
        %v668 = vand.u32 2147450879, %v474
        %v669 = vand.u32 2147450879, %v475
        %v670 = vand.u32 2147450879, %v476
        %v671 = vand.u32 2147450879, %v477
        %v672 = vand.u32 2147450879, %v478
        %v673 = vand.u32 2147450879, %v479
        %v674 = vand.u32 2147450879, %v480
        %v675 = vand.u32 2147450879, %v481
        %v676 = vld [vmem:[#allocation2] sm:$0xf]
        %v677 = vld [vmem:[#allocation2 + $0x4] sm:$0xf]
        %v678 = vld [vmem:[#allocation2 + $0x8] sm:$0xf]
        %v679 = vld [vmem:[#allocation2 + $0xc] sm:$0xf]
        %v680 = vld [vmem:[#allocation2 + $0x10] sm:$0xf]
        %v681 = vld [vmem:[#allocation2 + $0x14] sm:$0xf]
        %v682 = vld [vmem:[#allocation2 + $0x18] sm:$0xf]
        %v683 = vld [vmem:[#allocation2 + $0x1c] sm:$0xf]
        %v684 = vld [vmem:[#allocation2 + $0x20] sm:$0xf]
        %v685 = vld [vmem:[#allocation2 + $0x24] sm:$0xf]
        %v686 = vld [vmem:[#allocation2 + $0x28] sm:$0xf]
        %v687 = vld [vmem:[#allocation2 + $0x2c] sm:$0xf]
        %v688 = vld [vmem:[#allocation2 + $0x30] sm:$0xf]
        %v689 = vld [vmem:[#allocation2 + $0x34] sm:$0xf]
        %v690 = vld [vmem:[#allocation2 + $0x38] sm:$0xf]
        %v691 = vld [vmem:[#allocation2 + $0x3c] sm:$0xf]
        %v692 = vld [vmem:[#allocation2 + $0x40] sm:$0xf]
        %v693 = vld [vmem:[#allocation2 + $0x44] sm:$0xf]
        %v702 = vunpack.c.l.b16 %v668
        %v703 = vunpack.c.h.b16 %v668
        %v704 = vunpack.c.l.b16 %v669
        %v705 = vunpack.c.h.b16 %v669
        %v706 = vunpack.c.l.b16 %v670
        %v707 = vunpack.c.h.b16 %v670
        %v708 = vunpack.c.l.b16 %v671
        %v709 = vunpack.c.h.b16 %v671
        %v710 = vunpack.c.l.b16 %v672
        %v711 = vunpack.c.h.b16 %v672
        %v712 = vunpack.c.l.b16 %v673
        %v713 = vunpack.c.h.b16 %v673
        %v714 = vunpack.c.l.b16 %v674
        %v715 = vunpack.c.h.b16 %v674
        %v716 = vunpack.c.l.b16 %v675
        %v717 = vunpack.c.h.b16 %v675
        %v718 = vpack.c.b16 %v704, %v702
        %v719 = vpack.c.b16 %v705, %v703
        %v720 = vpack.c.b16 %v708, %v706
        %v721 = vpack.c.b16 %v709, %v707
        %v722 = vpack.c.b16 %v712, %v710
        %v723 = vpack.c.b16 %v713, %v711
        %v724 = vpack.c.b16 %v716, %v714
        %v725 = vpack.c.b16 %v717, %v715
        %v748 = vunpack.c.l.b16 %v676
        %v749 = vunpack.c.l.b16 %v677
        %v750 = vunpack.c.l.b16 %v678
        %v751 = vunpack.c.l.b16 %v679
        %v752 = vunpack.c.l.b16 %v680
        %v753 = vunpack.c.l.b16 %v681
        %v754 = vunpack.c.l.b16 %v682
        %v755 = vunpack.c.l.b16 %v683
        %v756 = vunpack.c.l.b16 %v684
        %v757 = vunpack.c.l.b16 %v685
        %v758 = vunpack.c.l.b16 %v686
        %v759 = vunpack.c.l.b16 %v687
        %v760 = vunpack.c.l.b16 %v688
        %v761 = vunpack.c.l.b16 %v689
        %v762 = vunpack.c.l.b16 %v690
        %v763 = vunpack.c.l.b16 %v691
        %v764 = vunpack.c.l.b16 %v692
        %v765 = vunpack.c.l.b16 %v693
        %v766 = vpack.c.b16 %v749, %v748
        %v767 = vpack.c.b16 %v751, %v750
        %v768 = vpack.c.b16 %v753, %v752
        %v769 = vpack.c.b16 %v755, %v754
        %v770 = vpack.c.b16 %v757, %v756
        %v771 = vpack.c.b16 %v759, %v758
        %v772 = vpack.c.b16 %v761, %v760
        %v773 = vpack.c.b16 %v763, %v762
        %v774 = vpack.c.b16 %v765, %v764
        %v785 = vsel %vm590, %v719, 0
        %v788 = vsel %vm590, %v721, 0
        %v791 = vsel %vm590, %v723, 0
        %v794 = vsel %vm590, %v725, 0
        %796 = vmatprep.subr.bf16.mxu0 0
        %797 = vmatpush1.bf16.msra.mxu0 %v766
        %798 = vmatprep.subr.bf16.mxu0 0
        %799 = vmatpush1.bf16.msra.mxu0 %v767
        %800 = vmatprep.subr.bf16.mxu0 0
        %801 = vmatpush1.bf16.msra.mxu0 %v768
        %802 = vmatprep.subr.bf16.mxu0 0
        %803 = vmatpush1.bf16.msra.mxu0 %v769
        %804 = vmatprep.subr.bf16.mxu0 0
        %805 = vmatpush1.bf16.msra.mxu0 %v770
        %806 = vmatprep.subr.bf16.mxu0 0
        %807 = vmatpush1.bf16.msra.mxu0 %v771
        %808 = vmatprep.subr.bf16.mxu0 0
        %809 = vmatpush1.bf16.msra.mxu0 %v772
        %810 = vmatprep.subr.bf16.mxu0 0
        %811 = vmatpush1.bf16.msra.mxu0 %v773
        %812 = vmatprep.subr.bf16.mxu0 0
        %813 = vmatpush1.bf16.msra.mxu0 %v774
        %814 = vmatprep.subr.bf16.mxu0 0
        %815 = vmatpush1.bf16.msra.mxu0 0
        %816 = vmatprep.subr.bf16.mxu0 0
        %817 = vmatpush1.bf16.msra.mxu0 0
        %818 = vmatprep.subr.bf16.mxu0 0
        %819 = vmatpush1.bf16.msra.mxu0 0
        %820 = vmatprep.subr.bf16.mxu0 0
        %821 = vmatpush1.bf16.msra.mxu0 0
        %822 = vmatprep.subr.bf16.mxu0 0
        %823 = vmatpush1.bf16.msra.mxu0 0
        %824 = vmatprep.subr.bf16.mxu0 0
        %825 = vmatpush1.bf16.msra.mxu0 0
        %826 = vmatprep.subr.bf16.mxu0 0
        %827 = vmatpush1.bf16.msra.mxu0 0
        %828 = vmatprep.mubr.bf16.mxu0 %v785
        %829 = vmatmul.mubr.bf16.gmra.mrb[0].mxu0 %v718
        %v830 = vpop.f32.mrb[0].mxu0
        %v831 = vadd.f32 0.0, %v830
        %v832 = vpop.f32.mrb[0].mxu0
        %v833 = vpop.f32.mrb[0].mxu0
        %v834 = vadd.f32 0.0, %v833
        %v835 = vpop.f32.mrb[0].mxu0
        %836 = vmatprep.mubr.bf16.mxu0 %v788
        %837 = vmatmul.mubr.bf16.gmra.mrb[0].mxu0 %v720
        %v838 = vpop.f32.mrb[0].mxu0
        %v839 = vadd.f32 0.0, %v838
        %v840 = vpop.f32.mrb[0].mxu0
        %v841 = vpop.f32.mrb[0].mxu0
        %v842 = vadd.f32 0.0, %v841
        %v843 = vpop.f32.mrb[0].mxu0
        %844 = vmatprep.mubr.bf16.mxu0 %v791
        %845 = vmatmul.mubr.bf16.gmra.mrb[0].mxu0 %v722
        %v846 = vpop.f32.mrb[0].mxu0
        %v847 = vadd.f32 0.0, %v846
        %v848 = vpop.f32.mrb[0].mxu0
        %v849 = vpop.f32.mrb[0].mxu0
        %v850 = vadd.f32 0.0, %v849
        %v851 = vpop.f32.mrb[0].mxu0
        %852 = vmatprep.mubr.bf16.mxu0 %v794
        %853 = vmatmul.mubr.bf16.gmra.mrb[0].mxu0 %v724
        %v854 = vpop.f32.mrb[0].mxu0
        %v855 = vadd.f32 0.0, %v854
        %v856 = vpop.f32.mrb[0].mxu0
        %v857 = vpop.f32.mrb[0].mxu0
        %v858 = vadd.f32 0.0, %v857
        %v859 = vpop.f32.mrb[0].mxu0
        %860 = vdwg.mxu0
        %v861 = vld [vmem:[%s3] sm:$0x1]
        %v862 = vld [vmem:[%s3 + $0x1] sm:$0x1]
        %v863 = vld [vmem:[%s3 + $0x2] sm:$0x1]
        %v864 = vld [vmem:[%s3 + $0x3] sm:$0x1]
        %v865 = vld [vmem:[%s3 + $0x4] sm:$0x1]
        %v866 = vld [vmem:[%s3 + $0x5] sm:$0x1]
        %v867 = vld [vmem:[%s466] sm:$0xff]
        %v868 = vld [vmem:[%s466 + $0x8] sm:$0xff]
        %v869 = vld [vmem:[%s466 + $0x10] sm:$0xff]
        %v870 = vld [vmem:[%s466 + $0x18] sm:$0xff]
        %v871 = vld [vmem:[%s466 + $0x20] sm:$0xff]
        %v872 = vld [vmem:[%s466 + $0x28] sm:$0xff]
        %v873 = vld [vmem:[%s466 + $0x30] sm:$0xff]
        %v874 = vld [vmem:[%s466 + $0x38] sm:$0xff]
        %v875 = vld [vmem:[%s385] sm:$0xff]
        %v876 = vld [vmem:[%s385 + $0x8] sm:$0xff]
        %v877 = vld [vmem:[%s385 + $0x10] sm:$0xff]
        %v878 = vld [vmem:[%s385 + $0x18] sm:$0xff]
        %v879 = vld [vmem:[%s385 + $0x20] sm:$0xff]
        %v880 = vld [vmem:[%s385 + $0x28] sm:$0xff]
        %v881 = vld [vmem:[%s385 + $0x30] sm:$0xff]
        %v882 = vld [vmem:[%s385 + $0x38] sm:$0xff]
        %v883 = vld [vmem:[%s394] sm:$0xff]
        %v884 = vld [vmem:[%s394 + $0x8] sm:$0xff]
        %v885 = vld [vmem:[%s394 + $0x10] sm:$0xff]
        %v886 = vld [vmem:[%s394 + $0x18] sm:$0xff]
        %v887 = vld [vmem:[%s394 + $0x20] sm:$0xff]
        %v888 = vld [vmem:[%s394 + $0x28] sm:$0xff]
        %v889 = vld [vmem:[%s394 + $0x30] sm:$0xff]
        %v890 = vld [vmem:[%s394 + $0x38] sm:$0xff]
        %v891 = vlaneseq
        %v892 = vshrl.u32 %v891, 7
        %v893 = vsub.s32 0, %v892
        %v894 = vrot.slane %v864, %v893
        %v895 = vmul.f32 %v883, %v894
        %v896 = vmul.f32 %v884, %v894
        %v897 = vmul.f32 %v885, %v894
        %v898 = vmul.f32 %v886, %v894
        %v899 = vmul.f32 %v887, %v894
        %v900 = vmul.f32 %v888, %v894
        %v901 = vmul.f32 %v889, %v894
        %v902 = vmul.f32 %v890, %v894
        %v903 = vlaneseq
        %v904 = vshrl.u32 %v903, 7
        %v905 = vsub.s32 0, %v904
        %v906 = vrot.slane %v865, %v905
        %v907 = vmul.f32 %v906, %v831
        %v908 = vmul.f32 %v906, %v834
        %v909 = vmul.f32 %v906, %v839
        %v910 = vmul.f32 %v906, %v842
        %v911 = vmul.f32 %v906, %v847
        %v912 = vmul.f32 %v906, %v850
        %v913 = vmul.f32 %v906, %v855
        %v914 = vmul.f32 %v906, %v858
        %v915 = vadd.f32 %v895, %v907
        %v916 = vadd.f32 %v896, %v908
        %v917 = vadd.f32 %v897, %v909
        %v918 = vadd.f32 %v898, %v910
        %v919 = vadd.f32 %v899, %v911
        %v920 = vadd.f32 %v900, %v912
        %v921 = vadd.f32 %v901, %v913
        %v922 = vadd.f32 %v902, %v914
        %v923 = vlaneseq
        %v924 = vshrl.u32 %v923, 7
        %v925 = vsub.s32 0, %v924
        %v926 = vrot.slane %v862, %v925
        %v927 = vmul.f32 %v867, %v926
        %v928 = vmul.f32 %v868, %v926
        %v929 = vmul.f32 %v869, %v926
        %v930 = vmul.f32 %v870, %v926
        %v931 = vmul.f32 %v871, %v926
        %v932 = vmul.f32 %v872, %v926
        %v933 = vmul.f32 %v873, %v926
        %v934 = vmul.f32 %v874, %v926
        %v935 = vsub.f32 1.0, %v875
        %v936 = vsub.f32 1.0, %v876
        %v937 = vsub.f32 1.0, %v877
        %v938 = vsub.f32 1.0, %v878
        %v939 = vsub.f32 1.0, %v879
        %v940 = vsub.f32 1.0, %v880
        %v941 = vsub.f32 1.0, %v881
        %v942 = vsub.f32 1.0, %v882
        %v943 = vmul.f32 %v927, %v935
        %v944 = vmul.f32 %v928, %v936
        %v945 = vmul.f32 %v929, %v937
        %v946 = vmul.f32 %v930, %v938
        %v947 = vmul.f32 %v931, %v939
        %v948 = vmul.f32 %v932, %v940
        %v949 = vmul.f32 %v933, %v941
        %v950 = vmul.f32 %v934, %v942
        %v951 = vlaneseq
        %v952 = vshrl.u32 %v951, 7
        %v953 = vsub.s32 0, %v952
        %v954 = vrot.slane %v866, %v953
        %v955 = vmul.f32 %v954, %v915
        %v956 = vmul.f32 %v954, %v916
        %v957 = vmul.f32 %v954, %v917
        %v958 = vmul.f32 %v954, %v918
        %v959 = vmul.f32 %v954, %v919
        %v960 = vmul.f32 %v954, %v920
        %v961 = vmul.f32 %v954, %v921
        %v962 = vmul.f32 %v954, %v922
        %v963 = vsub.f32 %v638, %v955
        %v964 = vsub.f32 %v641, %v956
        %v965 = vsub.f32 %v646, %v957
        %v966 = vsub.f32 %v649, %v958
        %v967 = vsub.f32 %v654, %v959
        %v968 = vsub.f32 %v657, %v960
        %v969 = vsub.f32 %v662, %v961
        %v970 = vsub.f32 %v665, %v962
        %v971 = vlaneseq
        %v972 = vshrl.u32 %v971, 7
        %v973 = vsub.s32 0, %v972
        %v974 = vrot.slane %v863, %v973
        %v975 = vmul.f32 %v974, %v963
        %v976 = vmul.f32 %v974, %v964
        %v977 = vmul.f32 %v974, %v965
        %v978 = vmul.f32 %v974, %v966
        %v979 = vmul.f32 %v974, %v967
        %v980 = vmul.f32 %v974, %v968
        %v981 = vmul.f32 %v974, %v969
        %v982 = vmul.f32 %v974, %v970
        %v983 = vadd.f32 %v943, %v975
        %v984 = vadd.f32 %v944, %v976
        %v985 = vadd.f32 %v945, %v977
        %v986 = vadd.f32 %v946, %v978
        %v987 = vadd.f32 %v947, %v979
        %v988 = vadd.f32 %v948, %v980
        %v989 = vadd.f32 %v949, %v981
        %v990 = vadd.f32 %v950, %v982
        %v991 = vlaneseq
        %v992 = vshrl.u32 %v991, 7
        %v993 = vsub.s32 0, %v992
        %v994 = vrot.slane %v861, %v993
        %vm995 = vcmp.gt.f32.partialorder %v983, %v994
        %vm996 = vcmp.gt.f32.partialorder %v984, %v994
        %vm997 = vcmp.gt.f32.partialorder %v985, %v994
        %vm998 = vcmp.gt.f32.partialorder %v986, %v994
        %vm999 = vcmp.gt.f32.partialorder %v987, %v994
        %vm1000 = vcmp.gt.f32.partialorder %v988, %v994
        %vm1001 = vcmp.gt.f32.partialorder %v989, %v994
        %vm1002 = vcmp.gt.f32.partialorder %v990, %v994
        %v1003 = vsel %vm995, 1, 0
        %v1004 = vsel %vm996, 1, 0
        %v1005 = vsel %vm997, 1, 0
        %v1006 = vsel %vm998, 1, 0
        %v1007 = vsel %vm999, 1, 0
        %v1008 = vsel %vm1000, 1, 0
        %v1009 = vsel %vm1001, 1, 0
        %v1010 = vsel %vm1002, 1, 0
        %v1011 = vcvt.s32.f32 %v1003
        %v1012 = vcvt.s32.f32 %v1004
        %v1013 = vcvt.s32.f32 %v1005
        %v1014 = vcvt.s32.f32 %v1006
        %v1015 = vcvt.s32.f32 %v1007
        %v1016 = vcvt.s32.f32 %v1008
        %v1017 = vcvt.s32.f32 %v1009
        %v1018 = vcvt.s32.f32 %v1010
        %1019 = vst [vmem:[%s440] sm:$0xff] %v983
        %1020 = vst [vmem:[%s440 + $0x8] sm:$0xff] %v984
        %1021 = vst [vmem:[%s440 + $0x10] sm:$0xff] %v985
        %1022 = vst [vmem:[%s440 + $0x18] sm:$0xff] %v986
        %1023 = vst [vmem:[%s440 + $0x20] sm:$0xff] %v987
        %1024 = vst [vmem:[%s440 + $0x28] sm:$0xff] %v988
        %1025 = vst [vmem:[%s440 + $0x30] sm:$0xff] %v989
        %1026 = vst [vmem:[%s440 + $0x38] sm:$0xff] %v990
        %1027 = vst [vmem:[%s447] sm:$0xff] %v1011
        %1028 = vst [vmem:[%s447 + $0x8] sm:$0xff] %v1012
        %1029 = vst [vmem:[%s447 + $0x10] sm:$0xff] %v1013
        %1030 = vst [vmem:[%s447 + $0x18] sm:$0xff] %v1014
        %1031 = vst [vmem:[%s447 + $0x20] sm:$0xff] %v1015
        %1032 = vst [vmem:[%s447 + $0x28] sm:$0xff] %v1016
        %1033 = vst [vmem:[%s447 + $0x30] sm:$0xff] %v1017
        %1034 = vst [vmem:[%s447 + $0x38] sm:$0xff] %v1018
        %1035 = vst [vmem:[%s454] sm:$0xff] %v915
        %1036 = vst [vmem:[%s454 + $0x8] sm:$0xff] %v916
        %1037 = vst [vmem:[%s454 + $0x10] sm:$0xff] %v917
        %1038 = vst [vmem:[%s454 + $0x18] sm:$0xff] %v918
        %1039 = vst [vmem:[%s454 + $0x20] sm:$0xff] %v919
        %1040 = vst [vmem:[%s454 + $0x28] sm:$0xff] %v920
        %1041 = vst [vmem:[%s454 + $0x30] sm:$0xff] %v921
        %1042 = vst [vmem:[%s454 + $0x38] sm:$0xff] %v922
        %s1043 = sand.u32 %s206, 1
        %s1044 = scalar_lea.sflag [#allocation4], %s1043
        %s1045 = sand.u32 %s206, 1
        %s1046 = smul.addr %s1045, 64
        %s1047 = scalar_lea.vmem [#allocation8], %s1046
        %s1048 = sand.u32 %s31, 1
        %s1049 = scalar_lea.sflag [#allocation10], %s1048
        %s1050 = sand.u32 %s232, 1
        %s1051 = smul.addr %s1050, 64
        %s1052 = scalar_lea.vmem [#allocation9], %s1051
        %s1053 = sand.u32 %s31, 1
        %s1054 = scalar_lea.sflag [#allocation10], %s1053
        %s1055 = sand.u32 %s258, 1
        %s1056 = smul.addr %s1055, 64
        %s1057 = scalar_lea.vmem [#allocation11], %s1056
        // Predicated region
        $region61: #{tpu_custom_call.1} parent=47 // pred_check
          %p1058 = pneg %p216
        $region62: #{tpu_custom_call.1} parent=47 // pred_check_branch
          %1060 = sbr.rel (%p1058) target = $region64
        $region63: #{tpu_custom_call.1} parent=47 // pred_region
          %s1061 = smul.u32 8, %s31
          %s1063 = ssub.s32 1024, 1024
          %1064 = vsyncadd %s1044, %s1063
          %s1065 = smul.addr %s1061, 128
          %s1066 = scalar_lea.hbm %s7, %s1065
          %s1067 = sshll.u32 %s1047, 4
          %s1068 = int_to_ptr.vmem [resolvable:$true] %s1067
          %1073 = dma.vmem_to_hbm [thread:$0]  %s1068, 1024, %s1066, %s1044, 128, 128, 8
        $region64: #{tpu_custom_call.1} parent=47 // pred_fallthru
          _
        // Predicated region
        $region65: #{tpu_custom_call.1} parent=47 // pred_check
          %p1074 = pneg %p242
        $region66: #{tpu_custom_call.1} parent=47 // pred_check_branch
          %1076 = sbr.rel (%p1074) target = $region68
        $region67: #{tpu_custom_call.1} parent=47 // pred_region
          %s1077 = smul.u32 8, %s31
          %s1079 = ssub.s32 1024, 1024
          %1080 = vsyncadd %s1049, %s1079
          %s1081 = smul.addr %s1077, 128
          %s1082 = scalar_lea.hbm %s8, %s1081
          %s1083 = sshll.u32 %s1052, 4
          %s1084 = int_to_ptr.vmem [resolvable:$true] %s1083
          %1089 = dma.vmem_to_hbm [thread:$0]  %s1084, 1024, %s1082, %s1049, 128, 128, 8
        $region68: #{tpu_custom_call.1} parent=47 // pred_fallthru
          _
        // Predicated region
        $region69: #{tpu_custom_call.1} parent=47 // pred_check
          %p1090 = pneg %p268
        $region70: #{tpu_custom_call.1} parent=47 // pred_check_branch
          %1092 = sbr.rel (%p1090) target = $region72
        $region71: #{tpu_custom_call.1} parent=47 // pred_region
          %s1093 = smul.u32 8, %s31
          %s1095 = ssub.s32 1024, 1024
          %1096 = vsyncadd %s1054, %s1095
          %s1097 = smul.addr %s1093, 128
          %s1098 = scalar_lea.hbm %s9, %s1097
          %s1099 = sshll.u32 %s1057, 4
          %s1100 = int_to_ptr.vmem [resolvable:$true] %s1099
          %1105 = dma.vmem_to_hbm [thread:$0]  %s1100, 1024, %s1098, %s1054, 128, 128, 8
        $region72: #{tpu_custom_call.1} parent=47 // pred_fallthru
          _
      $region48: #{tpu_custom_call.1} parent=5 // pred_fallthru
        _
      %p1106 = scmp.le.s32.totalorder 2, %s26
      // Predicated region
      $region73: #{tpu_custom_call.1} parent=5 // pred_check
        %p1107 = pneg %p1106
      $region74: #{tpu_custom_call.1} parent=5 // pred_check_branch
        %1109 = sbr.rel (%p1107) target = $region76
      $region75: #{tpu_custom_call.1} parent=5 // pred_region
        %s1110 = ssub.s32 %s26, 2
        // Predicated region
        $region77: #{tpu_custom_call.1} parent=75 // pred_check
          %p1111 = pneg %p222
        $region78: #{tpu_custom_call.1} parent=75 // pred_check_branch
          %1113 = sbr.rel (%p1111) target = $region80
        $region79: #{tpu_custom_call.1} parent=75 // pred_region
          %s1114 = sand.u32 %s207, 1
          %s1115 = scalar_lea.sflag [#allocation4], %s1114
          %s1116 = sand.u32 %s207, 1
          %s1117 = smul.addr %s1116, 64
          %s1118 = scalar_lea.vmem [#allocation8], %s1117
          %1119 = dma.done %s1115, 1024
        $region80: #{tpu_custom_call.1} parent=75 // pred_fallthru
          _
        // Predicated region
        $region81: #{tpu_custom_call.1} parent=75 // pred_check
          %p1120 = pneg %p248
        $region82: #{tpu_custom_call.1} parent=75 // pred_check_branch
          %1122 = sbr.rel (%p1120) target = $region84
        $region83: #{tpu_custom_call.1} parent=75 // pred_region
          %s1123 = sand.u32 %s32, 1
          %s1124 = scalar_lea.sflag [#allocation10], %s1123
          %s1125 = sand.u32 %s233, 1
          %s1126 = smul.addr %s1125, 64
          %s1127 = scalar_lea.vmem [#allocation9], %s1126
          %1128 = dma.done %s1124, 1024
        $region84: #{tpu_custom_call.1} parent=75 // pred_fallthru
          _
        // Predicated region
        $region85: #{tpu_custom_call.1} parent=75 // pred_check
          %p1129 = pneg %p274
        $region86: #{tpu_custom_call.1} parent=75 // pred_check_branch
          %1131 = sbr.rel (%p1129) target = $region88
        $region87: #{tpu_custom_call.1} parent=75 // pred_region
          %s1132 = sand.u32 %s32, 1
          %s1133 = scalar_lea.sflag [#allocation10], %s1132
          %s1134 = sand.u32 %s259, 1
          %s1135 = smul.addr %s1134, 64
          %s1136 = scalar_lea.vmem [#allocation11], %s1135
          %1137 = dma.done %s1133, 1024
        $region88: #{tpu_custom_call.1} parent=75 // pred_fallthru
          _
      $region76: #{tpu_custom_call.1} parent=5 // pred_fallthru
        _
    $region6: #{tpu_custom_call.1} parent=1 // loop_footer
      %s30 = sadd.s32 1, %s26
    $region7: #{tpu_custom_call.1} parent=1 // loop_footer_branch
      %25 = sbr.rel target = $region3
    $region8: #{tpu_custom_call.1} parent=1 // loop_exit
      _
    %1138 = vsyncpa [#allocation3], 1
    %s1139 = scalar_lea.sflag [#allocation3], 1
    %1140 = vsyncpa %s1139, 1
    %1141 = vsyncpa [#allocation6], 1
    %s1142 = scalar_lea.sflag [#allocation6], 1
    %1143 = vsyncpa %s1142, 1
    %1144 = vsyncpa [#allocation4], 1
    %s1145 = scalar_lea.sflag [#allocation4], 1
    %1146 = vsyncpa %s1145, 1
    %1147 = vsyncpa [#allocation10], 1
    %s1148 = scalar_lea.sflag [#allocation10], 1
    %1149 = vsyncpa %s1148, 1

</llo_original>
